<compile_context>
chip_gen: v6e
topology: v6e:2x2x1
jax: 0.10.0
libtpu: 0.0.40
codegen_flags: <defaults>
</compile_context>

<pallas_src>
import math
import functools

import jax
import jax.numpy as jnp
from jax.experimental import pallas as pl
from jax.experimental.pallas import tpu as pltpu


def _round_up(x, n):
    return ((x + n - 1) // n) * n


def _arc_margin_kernel(x_ref, w_ref, winv_ref, sxinv_ref, label_ref, out_ref, *,
                       s, cos_m, sin_m, th, mm, easy_margin, block_c, precision):
    """One (TB, TC) output tile of the ArcFace head.

    x_ref:     (TB, D)  matmul dtype, resident across the class grid axis
    w_ref:     (TC, D)  matmul dtype, streamed along the class grid axis
    winv_ref:  (1, TC)  f32, 1 / max(||w_c||, 1e-12)
    sxinv_ref: (TB, 1)  f32, s / max(||x_b||, 1e-12)  (pre-scaled by s)
    label_ref: (TB, 1)  int32 target class (-1 on padded rows)
    out_ref:   (TB, TC) s * cosine, with s * phi substituted at the label column
    """
    # MXU: raw (un-normalized) x @ w^T with f32 accumulation.  Normalization is
    # a post-scale on the small result (dot is linear in each operand).
    raw = jax.lax.dot_general(
        x_ref[...], w_ref[...],
        dimension_numbers=(((1,), (1,)), ((), ())),
        preferred_element_type=jnp.float32,
        precision=precision,
    )                                                              # (TB, TC) f32

    # s * cos(theta): two broadcast multiplies on the (TB, TC) tile.
    scaled = raw * sxinv_ref[...] * winv_ref[...]                  # (TB, TC)

    # Label-column mask for this class tile.
    labels = label_ref[...]                                        # (TB, 1)
    cls0 = pl.program_id(1) * block_c
    cls_ids = jax.lax.broadcasted_iota(jnp.int32, scaled.shape, 1) + cls0
    mask = cls_ids == labels                                       # (TB, TC)

    # Per-row margin epilogue: exactly one (or zero) column matches per row, so
    # a masked lane-reduce extracts the target cosine; sqrt/phi/threshold then
    # run on a (TB, 1) vector only.
    s_cos_t = jnp.sum(jnp.where(mask, scaled, 0.0), axis=-1, keepdims=True)
    cos_t = s_cos_t * (1.0 / s)
    sin_t = jnp.sqrt(jnp.clip(1.0 - cos_t * cos_t, 0.0, 1.0))
    phi_t = cos_t * cos_m - sin_t * sin_m
    if easy_margin:
        phi_t = jnp.where(cos_t > 0.0, phi_t, cos_t)
    else:
        phi_t = jnp.where(cos_t > th, phi_t, cos_t - mm)
    s_phi_t = phi_t * s                                            # (TB, 1)

    out_ref[...] = jnp.where(mask, s_phi_t, scaled).astype(out_ref.dtype)


def arc_margin_product(x, weight, label, *, s=30.0, m=0.5, easy_margin=False,
                       block_b=1024, block_c=1024, out_dtype=None,
                       mxu_dtype=None, w_inv=None, vmem_limit_bytes=None):
    """Pallas implementation of ArcMarginProduct.forward(input, label).

    mxu_dtype: optional dtype (e.g. jnp.bfloat16) for the matmul operands
               (f32 accumulation is kept); recommended for throughput.
    w_inv:     optional precomputed (C,) f32 array of 1/max(||w_c||, 1e-12);
               pass it in to avoid recomputing per call within a training step.
    """
    B, D = x.shape
    C, D2 = weight.shape
    assert D == D2, "in_features mismatch"
    out_dtype = x.dtype if out_dtype is None else out_dtype

    # Tile sizes: (8, 128)-aligned, clamped to the padded problem size.
    tb = min(block_b, _round_up(B, 8))
    tc = min(block_c, _round_up(C, 128))
    b_pad = _round_up(B, tb)
    c_pad = _round_up(C, tc)

    # Hoisted row inverse-norms (torch F.normalize eps=1e-12), pre-scaled by s.
    x32 = x.astype(jnp.float32)
    sx_inv = s * jax.lax.rsqrt(
        jnp.maximum(jnp.sum(x32 * x32, axis=1, keepdims=True), 1e-24))   # (B, 1)

    # Per-class inverse norms (cache/pass in per training step to avoid redoing).
    if w_inv is None:
        w32 = weight.astype(jnp.float32)
        w_inv = jax.lax.rsqrt(
            jnp.maximum(jnp.sum(w32 * w32, axis=1), 1e-24))              # (C,)
    w_inv = jnp.asarray(w_inv, jnp.float32).reshape(1, C)

    # Optional reduced-precision matmul operands (bf16 native MXU passes, half
    # the W HBM traffic).  Norms above stay f32 regardless.
    if mxu_dtype is not None and x.dtype != mxu_dtype:
        x_mm = x.astype(mxu_dtype)
        w_mm = weight.astype(mxu_dtype)
    else:
        x_mm, w_mm = x, weight
    precision = (jax.lax.Precision.HIGHEST
                 if x_mm.dtype == jnp.float32 else None)

    # Pad only when needed (choose C % block_c == 0 in production to skip the
    # full-W pad copy entirely).
    if b_pad != B:
        x_mm = jnp.pad(x_mm, ((0, b_pad - B), (0, 0)))
        sx_inv = jnp.pad(sx_inv, ((0, b_pad - B), (0, 0)))
    if c_pad != C:
        w_mm = jnp.pad(w_mm, ((0, c_pad - C), (0, 0)))
        w_inv = jnp.pad(w_inv, ((0, 0), (0, c_pad - C)))
    label_p = label.astype(jnp.int32).reshape(B, 1)
    if b_pad != B:
        # Padded labels are -1 so they never match any class column.
        label_p = jnp.pad(label_p, ((0, b_pad - B), (0, 0)), constant_values=-1)

    # Scoped VMEM budget: double-buffered x/W/out tiles + small operands +
    # a couple of (tb, tc) f32 temps.  Capped at 64 MiB (v7x physical VMEM).
    in_bytes = jnp.dtype(x_mm.dtype).itemsize
    out_bytes = jnp.dtype(out_dtype).itemsize
    if vmem_limit_bytes is None:
        est = (2 * (tb * D * in_bytes + tc * D * in_bytes + tb * tc * out_bytes
                    + tc * 4 + 2 * tb * 4)
               + 2 * tb * tc * 4)
        vmem_limit_bytes = int(min(max(est + (8 << 20), 32 << 20), 64 << 20))

    kernel = functools.partial(
        _arc_margin_kernel,
        s=float(s),
        cos_m=math.cos(m),
        sin_m=math.sin(m),
        th=math.cos(math.pi - m),
        mm=math.sin(math.pi - m) * m,
        easy_margin=easy_margin,
        block_c=tc,
        precision=precision,
    )

    grid = (b_pad // tb, c_pad // tc)

    out = pl.pallas_call(
        kernel,
        out_shape=jax.ShapeDtypeStruct((b_pad, c_pad), out_dtype),
        grid_spec=pltpu.PrefetchScalarGridSpec(
            num_scalar_prefetch=0,
            grid=grid,
            in_specs=[
                pl.BlockSpec((tb, D), lambda i, j: (i, 0)),   # x: resident over C
                pl.BlockSpec((tc, D), lambda i, j: (j, 0)),   # W: streamed over C
                pl.BlockSpec((1, tc), lambda i, j: (0, j)),   # 1/||w_c||
                pl.BlockSpec((tb, 1), lambda i, j: (i, 0)),   # s/||x_b||: resident
                pl.BlockSpec((tb, 1), lambda i, j: (i, 0)),   # labels: resident
            ],
            out_specs=pl.BlockSpec((tb, tc), lambda i, j: (i, j)),
        ),
        # Both grid axes are fully independent (no reduction axis); the class
        # axis is inner/fast so the batch-resident operands stay in VMEM.
        compiler_params=pltpu.CompilerParams(
            dimension_semantics=("parallel", "parallel"),
            vmem_limit_bytes=vmem_limit_bytes),
    )(x_mm, w_mm, w_inv, sx_inv, label_p)

    return out[:B, :C]


def _reference(x, weight, label, *, s=30.0, m=0.5, easy_margin=False):
    """Pure-JAX reference mirroring the PyTorch forward (sanity check)."""
    eps = 1e-12
    x_n = x / jnp.maximum(jnp.linalg.norm(x, axis=1, keepdims=True), eps)
    w_n = weight / jnp.maximum(jnp.linalg.norm(weight, axis=1, keepdims=True), eps)
    cosine = jnp.dot(x_n, w_n.T, precision=jax.lax.Precision.HIGHEST)
    sine = jnp.sqrt(jnp.clip(1.0 - cosine ** 2, 0.0, 1.0))
    phi = cosine * math.cos(m) - sine * math.sin(m)
    if easy_margin:
        phi = jnp.where(cosine > 0, phi, cosine)
    else:
        phi = jnp.where(cosine > math.cos(math.pi - m), phi,
                        cosine - math.sin(math.pi - m) * m)
    one_hot = jax.nn.one_hot(label, weight.shape[0], dtype=cosine.dtype)
    return (one_hot * phi + (1.0 - one_hot) * cosine) * s


if __name__ == "__main__":
    # Small deterministic setup; out_features=200 / block_c=128 and batch=16 /
    # block_b=8 exercise a real (2, 2) grid including class-tile padding.
    in_features, out_features, batch = 32, 200, 16

    key = jax.random.PRNGKey(0)
    k_x, k_w, k_l = jax.random.split(key, 3)

    x = jax.random.normal(k_x, (batch, in_features), dtype=jnp.float32)

    # Deterministic xavier_uniform_-style init for weight of shape (out, in).
    bound = math.sqrt(6.0 / (in_features + out_features))
    weight = jax.random.uniform(
        k_w, (out_features, in_features), dtype=jnp.float32,
        minval=-bound, maxval=bound)

    label = jax.random.randint(k_l, (batch,), 0, out_features, dtype=jnp.int32)

    out = arc_margin_product(x, weight, label, s=30.0, m=0.5,
                             easy_margin=False, block_b=8, block_c=128)
    out = jax.block_until_ready(out)
    ref = _reference(x, weight, label, s=30.0, m=0.5, easy_margin=False)
    assert out.shape == (batch, out_features)
    assert jnp.allclose(out, ref, atol=1e-3, rtol=1e-3), "mismatch vs reference"

    # Also check the easy_margin branch.
    out_em = arc_margin_product(x, weight, label, s=30.0, m=0.5,
                                easy_margin=True, block_b=8, block_c=128)
    out_em = jax.block_until_ready(out_em)
    ref_em = _reference(x, weight, label, s=30.0, m=0.5, easy_margin=True)
    assert jnp.allclose(out_em, ref_em, atol=1e-3, rtol=1e-3), "easy_margin mismatch"

    # Fast path smoke test: bf16 MXU operands, default (large) tiles so the
    # whole batch is one tile and W streams once.  bf16 operands introduce
    # ~1e-3-level cosine noise, so only a loose sanity check here.
    out_bf = arc_margin_product(x, weight, label, s=30.0, m=0.5,
                                easy_margin=False, mxu_dtype=jnp.bfloat16)
    out_bf = jax.block_until_ready(out_bf)
    assert out_bf.shape == (batch, out_features)
    assert bool(jnp.all(jnp.isfinite(out_bf)))
    assert float(jnp.mean(jnp.abs(out_bf - ref))) < 1.0

    print("KERNEL_OK")
</pallas_src>

<mosaic_0001>
module attributes {stable_mosaic.version = 11 : i64} {
  func.func @_arc_margin_kernel(%arg0: i32, %arg1: i32, %arg2: memref<8x32xf32, #tpu.memory_space<vmem>>, %arg3: memref<128x32xf32, #tpu.memory_space<vmem>>, %arg4: memref<1x128xf32, #tpu.memory_space<vmem>>, %arg5: memref<8x1xf32, #tpu.memory_space<vmem>>, %arg6: memref<8x1xi32, #tpu.memory_space<vmem>>, %arg7: memref<8x128xf32, #tpu.memory_space<vmem>>) attributes {dimension_semantics = [#tpu.dimension_semantics<parallel>, #tpu.dimension_semantics<parallel>], iteration_bounds = array<i64: 2, 2>, scalar_prefetch = 0 : i64, scratch_operands = 0 : i64, tpu.core_type = #tpu.core_type<tc>, window_params = [{transform_indices = @transform_0, window_bounds = array<i64: 8, 32>}, {transform_indices = @transform_1, window_bounds = array<i64: 128, 32>}, {transform_indices = @transform_2, window_bounds = array<i64: 1, 128>}, {transform_indices = @transform_3, window_bounds = array<i64: 8, 1>}, {transform_indices = @transform_4, window_bounds = array<i64: 8, 1>}, {transform_indices = @transform_5, window_bounds = array<i64: 8, 128>}]} {
    %c0 = arith.constant 0 : index
    %c0_0 = arith.constant 0 : index
    %0 = vector.load %arg2[%c0, %c0_0] : memref<8x32xf32, #tpu.memory_space<vmem>>, vector<8x32xf32>
    %c0_1 = arith.constant 0 : index
    %c0_2 = arith.constant 0 : index
    %1 = vector.load %arg3[%c0_1, %c0_2] : memref<128x32xf32, #tpu.memory_space<vmem>>, vector<128x32xf32>
    %cst = arith.constant dense<0.000000e+00> : vector<8x128xf32>
    %2 = tpu.matmul %0, %1, %cst {dimension_numbers = #tpu.dot_dimension_numbers<[1], [1], [0], [0], [0, 0, 1, 0], [], []>, precision = #tpu.contract_precision<fp32>} : vector<8x32xf32>, vector<128x32xf32>, vector<8x128xf32> -> vector<8x128xf32>
    %c0_3 = arith.constant 0 : index
    %c0_4 = arith.constant 0 : index
    %3 = vector.load %arg5[%c0_3, %c0_4] : memref<8x1xf32, #tpu.memory_space<vmem>>, vector<8x1xf32>
    %4 = vector.broadcast %3 : vector<8x1xf32> to vector<8x128xf32>
    %5 = arith.mulf %2, %4 : vector<8x128xf32>
    %c0_5 = arith.constant 0 : index
    %c0_6 = arith.constant 0 : index
    %6 = vector.load %arg4[%c0_5, %c0_6] : memref<1x128xf32, #tpu.memory_space<vmem>>, vector<1x128xf32>
    %7 = vector.broadcast %6 : vector<1x128xf32> to vector<8x128xf32>
    %8 = arith.mulf %5, %7 : vector<8x128xf32>
    %c0_7 = arith.constant 0 : index
    %c0_8 = arith.constant 0 : index
    %9 = vector.load %arg6[%c0_7, %c0_8] : memref<8x1xi32, #tpu.memory_space<vmem>>, vector<8x1xi32>
    %c128_i32 = arith.constant 128 : i32
    %10 = arith.muli %arg1, %c128_i32 : i32
    %11 = tpu.iota {dimensions = array<i32: 1>} : vector<8x128xi32>
    %12 = vector.broadcast %10 : i32 to vector<8x128xi32>
    %13 = arith.addi %11, %12 : vector<8x128xi32>
    %14 = vector.broadcast %9 : vector<8x1xi32> to vector<8x128xi32>
    %15 = arith.cmpi eq, %13, %14 : vector<8x128xi32>
    %cst_9 = arith.constant 0.000000e+00 : f32
    %16 = vector.broadcast %cst_9 : f32 to vector<8x128xf32>
    %17 = arith.select %15, %8, %16 : vector<8x128xi1>, vector<8x128xf32>
    %cst_10 = arith.constant dense<0.000000e+00> : vector<8xf32>
    %18 = vector.multi_reduction <add>, %17, %cst_10 [1] : vector<8x128xf32> to vector<8xf32>
    %19 = vector.shape_cast %18 : vector<8xf32> to vector<8x1xf32>
    %cst_11 = arith.constant 0.0333333351 : f32
    %20 = vector.broadcast %cst_11 : f32 to vector<8x1xf32>
    %21 = arith.mulf %19, %20 : vector<8x1xf32>
    %22 = arith.mulf %21, %21 : vector<8x1xf32>
    %cst_12 = arith.constant 1.000000e+00 : f32
    %23 = vector.broadcast %cst_12 : f32 to vector<8x1xf32>
    %24 = arith.subf %23, %22 : vector<8x1xf32>
    %cst_13 = arith.constant 0.000000e+00 : f32
    %cst_14 = arith.constant 1.000000e+00 : f32
    %25 = vector.broadcast %cst_13 : f32 to vector<8x1xf32>
    %26 = arith.maximumf %25, %24 : vector<8x1xf32>
    %27 = vector.broadcast %cst_14 : f32 to vector<8x1xf32>
    %28 = arith.minimumf %27, %26 : vector<8x1xf32>
    %29 = math.sqrt %28 : vector<8x1xf32>
    %cst_15 = arith.constant 0.87758255 : f32
    %30 = vector.broadcast %cst_15 : f32 to vector<8x1xf32>
    %31 = arith.mulf %21, %30 : vector<8x1xf32>
    %cst_16 = arith.constant 0.47942555 : f32
    %32 = vector.broadcast %cst_16 : f32 to vector<8x1xf32>
    %33 = arith.mulf %29, %32 : vector<8x1xf32>
    %34 = arith.subf %31, %33 : vector<8x1xf32>
    %cst_17 = arith.constant -0.87758255 : f32
    %35 = vector.broadcast %cst_17 : f32 to vector<8x1xf32>
    %36 = arith.cmpf ogt, %21, %35 : vector<8x1xf32>
    %cst_18 = arith.constant 0.239712775 : f32
    %37 = vector.broadcast %cst_18 : f32 to vector<8x1xf32>
    %38 = arith.subf %21, %37 : vector<8x1xf32>
    %39 = arith.select %36, %34, %38 : vector<8x1xi1>, vector<8x1xf32>
    %cst_19 = arith.constant 3.000000e+01 : f32
    %40 = vector.broadcast %cst_19 : f32 to vector<8x1xf32>
    %41 = arith.mulf %39, %40 : vector<8x1xf32>
    %42 = vector.shape_cast %41 : vector<8x1xf32> to vector<8x1xf32>
    %43 = vector.broadcast %42 : vector<8x1xf32> to vector<8x128xf32>
    %44 = arith.select %15, %43, %8 : vector<8x128xi1>, vector<8x128xf32>
    %c0_20 = arith.constant 0 : index
    %c0_21 = arith.constant 0 : index
    %45 = vector.load %arg7[%c0_20, %c0_21] : memref<8x128xf32, #tpu.memory_space<vmem>>, vector<8x128xf32>
    tpu.vector_store %arg7[%c0_20, %c0_21], %44 {strides = array<i32>} : memref<8x128xf32, #tpu.memory_space<vmem>>, vector<8x128xf32>,
    return
  }
  func.func @transform_0(%arg0: i32, %arg1: i32) -> (i32, i32) {
    %c0_i32 = arith.constant 0 : i32
    %c0_i32_0 = arith.constant 0 : i32
    return %arg0, %c0_i32 : i32, i32
  }
  func.func @transform_1(%arg0: i32, %arg1: i32) -> (i32, i32) {
    %c0_i32 = arith.constant 0 : i32
    %c0_i32_0 = arith.constant 0 : i32
    return %arg1, %c0_i32 : i32, i32
  }
  func.func @transform_2(%arg0: i32, %arg1: i32) -> (i32, i32) {
    %c0_i32 = arith.constant 0 : i32
    %c0_i32_0 = arith.constant 0 : i32
    return %c0_i32, %arg1 : i32, i32
  }
  func.func @transform_3(%arg0: i32, %arg1: i32) -> (i32, i32) {
    %c0_i32 = arith.constant 0 : i32
    %c0_i32_0 = arith.constant 0 : i32
    return %arg0, %c0_i32 : i32, i32
  }
  func.func @transform_4(%arg0: i32, %arg1: i32) -> (i32, i32) {
    %c0_i32 = arith.constant 0 : i32
    %c0_i32_0 = arith.constant 0 : i32
    return %arg0, %c0_i32 : i32, i32
  }
  func.func @transform_5(%arg0: i32, %arg1: i32) -> (i32, i32) {
    %c0_i32 = arith.constant 0 : i32
    return %arg0, %arg1 : i32, i32
  }
}

</mosaic_0001>

<llo_original>
// kernel: tpu_custom_call.1
$region0: #{tpu_custom_call.1}
  #allocation0 [shape = 'u32[]', space=smem, size = 0x4, offset = 0x4, fixed_abs, tag = 'smem constant byte address 0x4 - core index']
  #allocation1 [shape = 'u32[144,128]{1,0:T(1,128)}', space=vmem, size = 0x12000, scoped, tag = 'internal scratch']
  %s0 = inlined_call_operand.vmem [shape: f32[16,32], index: 0, kind: input, shape index: {}]
  %s1 = inlined_call_operand.vmem [shape: f32[256,32], index: 1, kind: input, shape index: {}]
  %s2 = inlined_call_operand.vmem [shape: f32[1,256], index: 2, kind: input, shape index: {}]
  %s3 = inlined_call_operand.vmem [shape: f32[16,1], index: 3, kind: input, shape index: {}]
  %s4 = inlined_call_operand.vmem [shape: s32[16,1], index: 4, kind: input, shape index: {}]
  %s5 = inlined_call_operand.hbm [shape: f32[16,256], index: 5, kind: output, shape index: {}]
  %s6 = sld [smem:[#allocation0]]
  $region53: #{tpu_custom_call.1} parent=0
    _
  %s8 = ssub.s32 1, %s6
  %s9 = scalar_select 0, %s8, %s6
  $region1: #{tpu_custom_call.1} parent=0
    #allocation2 [shape = 'u8[8192]{0}', space=vmem, size = 0x2000, scoped, tag = 'output window, operand 0']
    #allocation3 [shape = 's32[2]{0}', space=sflag, size = 0x8, scoped, tag = 'scoped memory for tpu_custom_call.1']
    %10 = vsyncpa [#allocation3], 0
    %s11 = scalar_lea.sflag [#allocation3], 1
    %12 = vsyncpa %s11, 0
    loop: start=0, step=1, limit=6
    $region2: #{tpu_custom_call.1} parent=1 // loop_pre_header
      _
    $region3: #{tpu_custom_call.1} parent=1 // loop_header
      %s14 = sphi 0, %s18
      %p15 = scmp.ge.s32.totalorder %s14, 6
      %s21 = sphi 0, %s33
      %s22 = sphi 0, %s29
      %s23 = sphi 0, %s21
      %s24 = sphi 0, %s22
      %s25 = sphi 0, %s23
      %s26 = sphi 0, %s24
      %s36 = sphi 0, %s38
      %s39 = sphi 0, %s36
      %s40 = sphi 0, %s39
      %s56 = sphi 0, %s40
      %s62 = sphi 0, %s64
      %s65 = sphi 0, %s62
      %s66 = sphi 0, %s65
      %s82 = sphi 0, %s66
      %s88 = sphi 0, %s90
      %s91 = sphi 0, %s88
      %s92 = sphi 0, %s91
      %s108 = sphi 0, %s92
      %s114 = sphi 0, %s116
      %s117 = sphi 0, %s114
      %s118 = sphi 0, %s117
      %s134 = sphi 0, %s118
      %s140 = sphi 0, %s142
      %s143 = sphi 0, %s140
      %s144 = sphi 0, %s143
      %s160 = sphi 0, %s144
      %s168 = sphi 0, %s170
      %s171 = sphi 0, %s168
      %s172 = sphi 0, %s171
      %s188 = sphi 0, %s172
    $region4: #{tpu_custom_call.1} parent=1 // loop_header_branch
      %17 = sbr.rel (%p15) target = $region8
    $region5: #{tpu_custom_call.1} parent=1 // loop_body
      %s19 = ssub.s32 %s14, 1
      %s20 = ssub.s32 %s14, 2
      %s27 = sadd.s32 1, %s22
      %p28 = scmp.ge.s32.totalorder %s27, 2
      %s29 = scalar_select %p28, 0, %s27
      %s30 = sadd.s32 1, %s21
      %s31 = scalar_select %p28, %s30, %s21
      %p32 = scmp.ge.s32.totalorder %s31, 2
      %s33 = scalar_select %p32, 0, %s31
      %s34 = ssub.s32 %s21, %s33
      %p35 = scmp.eq.s32.totalorder %s34, 0
      %s37 = sadd.s32 %s36, 1
      %s38 = scalar_select %p35, %s36, %s37
      %p41 = pneg %p35
      %p42 = scmp.eq.s32.totalorder %s14, 3
      %p43 = por %p41, %p42
      %p44 = scmp.ne.s32.totalorder %s36, %s39
      %p45 = scmp.eq.s32.totalorder %s14, 0
      %p46 = por %p44, %p45
      %p47 = scmp.ne.s32.totalorder %s36, %s39
      %p48 = scmp.eq.s32.totalorder %s19, 3
      %p49 = por %p47, %p48
      %p50 = scmp.ne.s32.totalorder %s39, %s40
      %p51 = scmp.eq.s32.totalorder %s19, 0
      %p52 = por %p50, %p51
      %p53 = scmp.ne.s32.totalorder %s39, %s40
      %p54 = scmp.eq.s32.totalorder %s20, 3
      %p55 = por %p53, %p54
      %p57 = scmp.ne.s32.totalorder %s40, %s56
      %p58 = scmp.eq.s32.totalorder %s20, 0
      %p59 = por %p57, %p58
      %s60 = ssub.s32 %s22, %s29
      %p61 = scmp.eq.s32.totalorder %s60, 0
      %s63 = sadd.s32 %s62, 1
      %s64 = scalar_select %p61, %s62, %s63
      %p67 = pneg %p61
      %p68 = scmp.eq.s32.totalorder %s14, 3
      %p69 = por %p67, %p68
      %p70 = scmp.ne.s32.totalorder %s62, %s65
      %p71 = scmp.eq.s32.totalorder %s14, 0
      %p72 = por %p70, %p71
      %p73 = scmp.ne.s32.totalorder %s62, %s65
      %p74 = scmp.eq.s32.totalorder %s19, 3
      %p75 = por %p73, %p74
      %p76 = scmp.ne.s32.totalorder %s65, %s66
      %p77 = scmp.eq.s32.totalorder %s19, 0
      %p78 = por %p76, %p77
      %p79 = scmp.ne.s32.totalorder %s65, %s66
      %p80 = scmp.eq.s32.totalorder %s20, 3
      %p81 = por %p79, %p80
      %p83 = scmp.ne.s32.totalorder %s66, %s82
      %p84 = scmp.eq.s32.totalorder %s20, 0
      %p85 = por %p83, %p84
      %s86 = ssub.s32 %s22, %s29
      %p87 = scmp.eq.s32.totalorder %s86, 0
      %s89 = sadd.s32 %s88, 1
      %s90 = scalar_select %p87, %s88, %s89
      %p93 = pneg %p87
      %p94 = scmp.eq.s32.totalorder %s14, 3
      %p95 = por %p93, %p94
      %p96 = scmp.ne.s32.totalorder %s88, %s91
      %p97 = scmp.eq.s32.totalorder %s14, 0
      %p98 = por %p96, %p97
      %p99 = scmp.ne.s32.totalorder %s88, %s91
      %p100 = scmp.eq.s32.totalorder %s19, 3
      %p101 = por %p99, %p100
      %p102 = scmp.ne.s32.totalorder %s91, %s92
      %p103 = scmp.eq.s32.totalorder %s19, 0
      %p104 = por %p102, %p103
      %p105 = scmp.ne.s32.totalorder %s91, %s92
      %p106 = scmp.eq.s32.totalorder %s20, 3
      %p107 = por %p105, %p106
      %p109 = scmp.ne.s32.totalorder %s92, %s108
      %p110 = scmp.eq.s32.totalorder %s20, 0
      %p111 = por %p109, %p110
      %s112 = ssub.s32 %s21, %s33
      %p113 = scmp.eq.s32.totalorder %s112, 0
      %s115 = sadd.s32 %s114, 1
      %s116 = scalar_select %p113, %s114, %s115
      %p119 = pneg %p113
      %p120 = scmp.eq.s32.totalorder %s14, 3
      %p121 = por %p119, %p120
      %p122 = scmp.ne.s32.totalorder %s114, %s117
      %p123 = scmp.eq.s32.totalorder %s14, 0
      %p124 = por %p122, %p123
      %p125 = scmp.ne.s32.totalorder %s114, %s117
      %p126 = scmp.eq.s32.totalorder %s19, 3
      %p127 = por %p125, %p126
      %p128 = scmp.ne.s32.totalorder %s117, %s118
      %p129 = scmp.eq.s32.totalorder %s19, 0
      %p130 = por %p128, %p129
      %p131 = scmp.ne.s32.totalorder %s117, %s118
      %p132 = scmp.eq.s32.totalorder %s20, 3
      %p133 = por %p131, %p132
      %p135 = scmp.ne.s32.totalorder %s118, %s134
      %p136 = scmp.eq.s32.totalorder %s20, 0
      %p137 = por %p135, %p136
      %s138 = ssub.s32 %s21, %s33
      %p139 = scmp.eq.s32.totalorder %s138, 0
      %s141 = sadd.s32 %s140, 1
      %s142 = scalar_select %p139, %s140, %s141
      %p145 = pneg %p139
      %p146 = scmp.eq.s32.totalorder %s14, 3
      %p147 = por %p145, %p146
      %p148 = scmp.ne.s32.totalorder %s140, %s143
      %p149 = scmp.eq.s32.totalorder %s14, 0
      %p150 = por %p148, %p149
      %p151 = scmp.ne.s32.totalorder %s140, %s143
      %p152 = scmp.eq.s32.totalorder %s19, 3
      %p153 = por %p151, %p152
      %p154 = scmp.ne.s32.totalorder %s143, %s144
      %p155 = scmp.eq.s32.totalorder %s19, 0
      %p156 = por %p154, %p155
      %p157 = scmp.ne.s32.totalorder %s143, %s144
      %p158 = scmp.eq.s32.totalorder %s20, 3
      %p159 = por %p157, %p158
      %p161 = scmp.ne.s32.totalorder %s144, %s160
      %p162 = scmp.eq.s32.totalorder %s20, 0
      %p163 = por %p161, %p162
      %s164 = ssub.s32 %s21, %s33
      %s165 = ssub.s32 %s22, %s29
      %s166 = sor.u32 %s164, %s165
      %p167 = scmp.eq.s32.totalorder %s166, 0
      %s169 = sadd.s32 %s168, 1
      %s170 = scalar_select %p167, %s168, %s169
      %p173 = pneg %p167
      %p174 = scmp.eq.s32.totalorder %s14, 3
      %p175 = por %p173, %p174
      %p176 = scmp.ne.s32.totalorder %s168, %s171
      %p177 = scmp.eq.s32.totalorder %s14, 0
      %p178 = por %p176, %p177
      %p179 = scmp.ne.s32.totalorder %s168, %s171
      %p180 = scmp.eq.s32.totalorder %s19, 3
      %p181 = por %p179, %p180
      %p182 = scmp.ne.s32.totalorder %s171, %s172
      %p183 = scmp.eq.s32.totalorder %s19, 0
      %p184 = por %p182, %p183
      %p185 = scmp.ne.s32.totalorder %s171, %s172
      %p186 = scmp.eq.s32.totalorder %s20, 3
      %p187 = por %p185, %p186
      %p189 = scmp.ne.s32.totalorder %s172, %s188
      %p190 = scmp.eq.s32.totalorder %s20, 0
      %p191 = por %p189, %p190
      %p192 = scmp.le.s32.totalorder 1, %s14
      %p193 = scmp.lt.s32.totalorder %s14, 5
      %p194 = pnand %p192, %p193
      %p195 = pneg %p194
      // Predicated region
      $region9: #{tpu_custom_call.1} parent=5 // pred_check
        _
      $region10: #{tpu_custom_call.1} parent=5 // pred_check_branch
        %197 = sbr.rel (%p194) target = $region12
      $region11: #{tpu_custom_call.1} parent=5 // pred_region
        %s198 = ssub.s32 %s14, 1
      $region12: #{tpu_custom_call.1} parent=5 // pred_fallthru
        _
      %p199 = scmp.lt.s32.totalorder %s14, 4
      // Predicated region
      $region13: #{tpu_custom_call.1} parent=5 // pred_check
        %p200 = pneg %p199
      $region14: #{tpu_custom_call.1} parent=5 // pred_check_branch
        %202 = sbr.rel (%p200) target = $region16
      $region15: #{tpu_custom_call.1} parent=5 // pred_region
        // Predicated region
        $region17: #{tpu_custom_call.1} parent=15 // pred_check
          %p203 = pneg %p46
        $region18: #{tpu_custom_call.1} parent=15 // pred_check_branch
          %205 = sbr.rel (%p203) target = $region20
        $region19: #{tpu_custom_call.1} parent=15 // pred_region
          %p206 = scmp.lt.s32.totalorder %s21, 1
          %s207 = scalar_select %p206, %s21, 1
          %s208 = smul.addr %s207, 8
          %s209 = scalar_lea.vmem %s0, %s208
        $region20: #{tpu_custom_call.1} parent=15 // pred_fallthru
          _
        // Predicated region
        $region21: #{tpu_custom_call.1} parent=15 // pred_check
          %p210 = pneg %p72
        $region22: #{tpu_custom_call.1} parent=15 // pred_check_branch
          %212 = sbr.rel (%p210) target = $region24
        $region23: #{tpu_custom_call.1} parent=15 // pred_region
          %s213 = smul.u32 16, %s22
          %p214 = scmp.lt.s32.totalorder %s213, 31
          %s215 = scalar_select %p214, %s213, 31
          %s216 = smul.addr %s215, 8
          %s217 = scalar_lea.vmem %s1, %s216
          %s218 = smul.u32 16, %s22
        $region24: #{tpu_custom_call.1} parent=15 // pred_fallthru
          _
        // Predicated region
        $region25: #{tpu_custom_call.1} parent=15 // pred_check
          %p219 = pneg %p98
        $region26: #{tpu_custom_call.1} parent=15 // pred_check_branch
          %221 = sbr.rel (%p219) target = $region28
        $region27: #{tpu_custom_call.1} parent=15 // pred_region
          %p222 = scmp.lt.s32.totalorder %s22, 1
          %s223 = scalar_select %p222, %s22, 1
          %s224 = scalar_lea.vmem %s2, %s223
        $region28: #{tpu_custom_call.1} parent=15 // pred_fallthru
          _
        // Predicated region
        $region29: #{tpu_custom_call.1} parent=15 // pred_check
          %p225 = pneg %p124
        $region30: #{tpu_custom_call.1} parent=15 // pred_check_branch
          %227 = sbr.rel (%p225) target = $region32
        $region31: #{tpu_custom_call.1} parent=15 // pred_region
          %p228 = scmp.lt.s32.totalorder %s21, 1
          %s229 = scalar_select %p228, %s21, 1
          %s230 = smul.addr %s229, 8
          %s231 = scalar_lea.vmem %s3, %s230
        $region32: #{tpu_custom_call.1} parent=15 // pred_fallthru
          _
        // Predicated region
        $region33: #{tpu_custom_call.1} parent=15 // pred_check
          %p232 = pneg %p150
        $region34: #{tpu_custom_call.1} parent=15 // pred_check_branch
          %234 = sbr.rel (%p232) target = $region36
        $region35: #{tpu_custom_call.1} parent=15 // pred_region
          %p235 = scmp.lt.s32.totalorder %s21, 1
          %s236 = scalar_select %p235, %s21, 1
          %s237 = smul.addr %s236, 8
          %s238 = scalar_lea.vmem %s4, %s237
        $region36: #{tpu_custom_call.1} parent=15 // pred_fallthru
          _
      $region16: #{tpu_custom_call.1} parent=5 // pred_fallthru
        _
      %p239 = scmp.le.s32.totalorder 1, %s14
      %p240 = scmp.lt.s32.totalorder %s14, 5
      %p241 = pnand %p239, %p240
      %p242 = pneg %p241
      // Predicated region
      $region37: #{tpu_custom_call.1} parent=5 // pred_check
        _
      $region38: #{tpu_custom_call.1} parent=5 // pred_check_branch
        %244 = sbr.rel (%p241) target = $region40
      $region39: #{tpu_custom_call.1} parent=5 // pred_region
        %s245 = ssub.s32 %s14, 1
        %p246 = scmp.lt.s32.totalorder %s23, 1
        %s247 = scalar_select %p246, %s23, 1
        %s248 = smul.addr %s247, 8
        %s249 = scalar_lea.vmem %s0, %s248
        %p250 = pneg %p52
        %p251 = pneg %p49
        %s252 = smul.u32 16, %s24
        %p253 = scmp.lt.s32.totalorder %s252, 31
        %s254 = scalar_select %p253, %s252, 31
        %s255 = smul.addr %s254, 8
        %s256 = scalar_lea.vmem %s1, %s255
        %p257 = pneg %p78
        %p258 = pneg %p75
        %p259 = scmp.lt.s32.totalorder %s24, 1
        %s260 = scalar_select %p259, %s24, 1
        %s261 = scalar_lea.vmem %s2, %s260
        %p262 = pneg %p104
        %p263 = pneg %p101
        %p264 = scmp.lt.s32.totalorder %s23, 1
        %s265 = scalar_select %p264, %s23, 1
        %s266 = smul.addr %s265, 8
        %s267 = scalar_lea.vmem %s3, %s266
        %p268 = pneg %p130
        %p269 = pneg %p127
        %p270 = scmp.lt.s32.totalorder %s23, 1
        %s271 = scalar_select %p270, %s23, 1
        %s272 = smul.addr %s271, 8
        %s273 = scalar_lea.vmem %s4, %s272
        %p274 = pneg %p156
        %p275 = pneg %p153
        %p276 = pneg %p184
        %p277 = pneg %p181
        %s278 = sand.u32 %s171, 1
        %s279 = scalar_lea.sflag [#allocation3], %s278
        %s280 = sand.u32 %s171, 1
        %s281 = smul.addr %s280, 8
        %s282 = scalar_lea.vmem [#allocation2], %s281
        %p283 = scmp.lt.s32.totalorder %s23, 1
        %s284 = scalar_select %p283, %s23, 1
        %s285 = smul.addr %s284, 8
        %s286 = scalar_lea.vmem %s0, %s285
        %s287 = smul.u32 16, %s24
        %p288 = scmp.lt.s32.totalorder %s287, 31
        %s289 = scalar_select %p288, %s287, 31
        %s290 = smul.addr %s289, 8
        %s291 = scalar_lea.vmem %s1, %s290
        %s292 = smul.u32 16, %s24
        %p293 = scmp.lt.s32.totalorder %s24, 1
        %s294 = scalar_select %p293, %s24, 1
        %s295 = scalar_lea.vmem %s2, %s294
        %p296 = scmp.lt.s32.totalorder %s23, 1
        %s297 = scalar_select %p296, %s23, 1
        %s298 = smul.addr %s297, 8
        %s299 = scalar_lea.vmem %s3, %s298
        %p300 = scmp.lt.s32.totalorder %s23, 1
        %s301 = scalar_select %p300, %s23, 1
        %s302 = smul.addr %s301, 8
        %s303 = scalar_lea.vmem %s4, %s302
        %v304 = vld [vmem:[%s286] sm:$0xff]
        %v305 = vld [vmem:[%s291] sm:$0xff]
        %v306 = vld [vmem:[%s291 + $0x8] sm:$0xff]
        %v307 = vld [vmem:[%s291 + $0x10] sm:$0xff]
        %v308 = vld [vmem:[%s291 + $0x18] sm:$0xff]
        %v309 = vld [vmem:[%s291 + $0x20] sm:$0xff]
        %v310 = vld [vmem:[%s291 + $0x28] sm:$0xff]
        %v311 = vld [vmem:[%s291 + $0x30] sm:$0xff]
        %v312 = vld [vmem:[%s291 + $0x38] sm:$0xff]
        %v313 = vld [vmem:[%s291 + $0x40] sm:$0xff]
        %v314 = vld [vmem:[%s291 + $0x48] sm:$0xff]
        %v315 = vld [vmem:[%s291 + $0x50] sm:$0xff]
        %v316 = vld [vmem:[%s291 + $0x58] sm:$0xff]
        %v317 = vld [vmem:[%s291 + $0x60] sm:$0xff]
        %v318 = vld [vmem:[%s291 + $0x68] sm:$0xff]
        %v319 = vld [vmem:[%s291 + $0x70] sm:$0xff]
        %v320 = vld [vmem:[%s291 + $0x78] sm:$0xff]
        %vm321 = vcmask 261120
        %v323 = vsel %vm321, %v304, 0
        %v326 = vsel %vm321, %v305, 0
        %v329 = vsel %vm321, %v306, 0
        %v332 = vsel %vm321, %v307, 0
        %v335 = vsel %vm321, %v308, 0
        %v338 = vsel %vm321, %v309, 0
        %v341 = vsel %vm321, %v310, 0
        %v344 = vsel %vm321, %v311, 0
        %v347 = vsel %vm321, %v312, 0
        %v350 = vsel %vm321, %v313, 0
        %v353 = vsel %vm321, %v314, 0
        %v356 = vsel %vm321, %v315, 0
        %v359 = vsel %vm321, %v316, 0
        %v362 = vsel %vm321, %v317, 0
        %v365 = vsel %vm321, %v318, 0
        %v368 = vsel %vm321, %v319, 0
        %v371 = vsel %vm321, %v320, 0
        %373 = vmatprep.subr.mxu0 0.0
        %v374 = vand.u32 %v371, 4294901760
        %375 = vmatpush1.xpose.msra.mxu0 %v374
        %376 = vmatprep.subr.mxu0 0.0
        %v377 = vand.u32 %v368, 4294901760
        %378 = vmatpush1.xpose.msra.mxu0 %v377
        %379 = vmatprep.subr.mxu0 0.0
        %v380 = vand.u32 %v365, 4294901760
        %381 = vmatpush1.xpose.msra.mxu0 %v380
        %382 = vmatprep.subr.mxu0 0.0
        %v383 = vand.u32 %v362, 4294901760
        %384 = vmatpush1.xpose.msra.mxu0 %v383
        %385 = vmatprep.subr.mxu0 0.0
        %v386 = vand.u32 %v359, 4294901760
        %387 = vmatpush1.xpose.msra.mxu0 %v386
        %388 = vmatprep.subr.mxu0 0.0
        %v389 = vand.u32 %v356, 4294901760
        %390 = vmatpush1.xpose.msra.mxu0 %v389
        %391 = vmatprep.subr.mxu0 0.0
        %v392 = vand.u32 %v353, 4294901760
        %393 = vmatpush1.xpose.msra.mxu0 %v392
        %394 = vmatprep.subr.mxu0 0.0
        %v395 = vand.u32 %v350, 4294901760
        %396 = vmatpush1.xpose.msra.mxu0 %v395
        %397 = vmatprep.subr.mxu0 0.0
        %v398 = vand.u32 %v347, 4294901760
        %399 = vmatpush1.xpose.msra.mxu0 %v398
        %400 = vmatprep.subr.mxu0 0.0
        %v401 = vand.u32 %v344, 4294901760
        %402 = vmatpush1.xpose.msra.mxu0 %v401
        %403 = vmatprep.subr.mxu0 0.0
        %v404 = vand.u32 %v341, 4294901760
        %405 = vmatpush1.xpose.msra.mxu0 %v404
        %406 = vmatprep.subr.mxu0 0.0
        %v407 = vand.u32 %v338, 4294901760
        %408 = vmatpush1.xpose.msra.mxu0 %v407
        %409 = vmatprep.subr.mxu0 0.0
        %v410 = vand.u32 %v335, 4294901760
        %411 = vmatpush1.xpose.msra.mxu0 %v410
        %412 = vmatprep.subr.mxu0 0.0
        %v413 = vand.u32 %v332, 4294901760
        %414 = vmatpush1.xpose.msra.mxu0 %v413
        %415 = vmatprep.subr.mxu0 0.0
        %v416 = vand.u32 %v329, 4294901760
        %417 = vmatpush1.xpose.msra.mxu0 %v416
        %418 = vmatprep.subr.mxu0 0.0
        %v419 = vand.u32 %v326, 4294901760
        %420 = vmatpush1.xpose.msra.mxu0 %v419
        %421 = vmatprep.subr.mxu0 0.0
        %422 = vmatpush2.xpose.msra.mxu0 0.0
        %423 = vmatprep.subr.mxu0 0.0
        %424 = vmatpush2.xpose.msra.mxu0 0.0
        %425 = vmatprep.subr.mxu0 0.0
        %426 = vmatpush2.xpose.msra.mxu0 0.0
        %427 = vmatprep.subr.mxu0 0.0
        %428 = vmatpush2.xpose.msra.mxu0 0.0
        %429 = vmatprep.subr.mxu0 0.0
        %430 = vmatpush2.xpose.msra.mxu0 0.0
        %431 = vmatprep.subr.mxu0 0.0
        %432 = vmatpush2.xpose.msra.mxu0 0.0
        %433 = vmatprep.subr.mxu0 0.0
        %434 = vmatpush2.xpose.msra.mxu0 0.0
        %435 = vmatprep.subr.mxu0 0.0
        %436 = vmatpush2.xpose.msra.mxu0 0.0
        %437 = vmatprep.subr.mxu0 0.0
        %438 = vmatpush2.xpose.msra.mxu0 0.0
        %439 = vmatprep.subr.mxu0 0.0
        %440 = vmatpush2.xpose.msra.mxu0 0.0
        %441 = vmatprep.subr.mxu0 0.0
        %442 = vmatpush2.xpose.msra.mxu0 0.0
        %443 = vmatprep.subr.mxu0 0.0
        %444 = vmatpush2.xpose.msra.mxu0 0.0
        %445 = vmatprep.subr.mxu0 0.0
        %446 = vmatpush2.xpose.msra.mxu0 0.0
        %447 = vmatprep.subr.mxu0 0.0
        %448 = vmatpush2.xpose.msra.mxu0 0.0
        %449 = vmatprep.subr.mxu0 0.0
        %450 = vmatpush2.xpose.msra.mxu0 0.0
        %451 = vmatprep.subr.mxu0 0.0
        %452 = vmatpush2.xpose.msra.mxu0 0.0
        %453 = vmatprep.mubr.f32.mxu0 0.0
        %v454 = vand.u32 %v323, 4294901760
        %v455 = vsub.f32 %v323, %v454
        %v456 = vand.u32 %v455, 4294901760
        %v457 = vsub.f32 %v455, %v456
        %v458 = vand.u32 %v457, 4294901760
        %459 = vmatmul.mubr.f32.gmra.mxu0 %v458
        %v460 = vpop.f32.mrf.mxu0
        %v461 = vadd.f32 0.0, %v460
        %v462 = vpop.f32.mrf.mxu0
        %463 = vdwg.mxu0
        %464 = vmatprep.subr.mxu0 0.0
        %v465 = vand.u32 %v371, 4294901760
        %v466 = vsub.f32 %v371, %v465
        %v467 = vand.u32 %v466, 4294901760
        %v468 = vsub.f32 %v466, %v467
        %v469 = vand.u32 %v468, 4294901760
        %470 = vmatpush1.xpose.msra.mxu0 %v469
        %471 = vmatprep.subr.mxu0 0.0
        %v472 = vand.u32 %v368, 4294901760
        %v473 = vsub.f32 %v368, %v472
        %v474 = vand.u32 %v473, 4294901760
        %v475 = vsub.f32 %v473, %v474
        %v476 = vand.u32 %v475, 4294901760
        %477 = vmatpush1.xpose.msra.mxu0 %v476
        %478 = vmatprep.subr.mxu0 0.0
        %v479 = vand.u32 %v365, 4294901760
        %v480 = vsub.f32 %v365, %v479
        %v481 = vand.u32 %v480, 4294901760
        %v482 = vsub.f32 %v480, %v481
        %v483 = vand.u32 %v482, 4294901760
        %484 = vmatpush1.xpose.msra.mxu0 %v483
        %485 = vmatprep.subr.mxu0 0.0
        %v486 = vand.u32 %v362, 4294901760
        %v487 = vsub.f32 %v362, %v486
        %v488 = vand.u32 %v487, 4294901760
        %v489 = vsub.f32 %v487, %v488
        %v490 = vand.u32 %v489, 4294901760
        %491 = vmatpush1.xpose.msra.mxu0 %v490
        %492 = vmatprep.subr.mxu0 0.0
        %v493 = vand.u32 %v359, 4294901760
        %v494 = vsub.f32 %v359, %v493
        %v495 = vand.u32 %v494, 4294901760
        %v496 = vsub.f32 %v494, %v495
        %v497 = vand.u32 %v496, 4294901760
        %498 = vmatpush1.xpose.msra.mxu0 %v497
        %499 = vmatprep.subr.mxu0 0.0
        %v500 = vand.u32 %v356, 4294901760
        %v501 = vsub.f32 %v356, %v500
        %v502 = vand.u32 %v501, 4294901760
        %v503 = vsub.f32 %v501, %v502
        %v504 = vand.u32 %v503, 4294901760
        %505 = vmatpush1.xpose.msra.mxu0 %v504
        %506 = vmatprep.subr.mxu0 0.0
        %v507 = vand.u32 %v353, 4294901760
        %v508 = vsub.f32 %v353, %v507
        %v509 = vand.u32 %v508, 4294901760
        %v510 = vsub.f32 %v508, %v509
        %v511 = vand.u32 %v510, 4294901760
        %512 = vmatpush1.xpose.msra.mxu0 %v511
        %513 = vmatprep.subr.mxu0 0.0
        %v514 = vand.u32 %v350, 4294901760
        %v515 = vsub.f32 %v350, %v514
        %v516 = vand.u32 %v515, 4294901760
        %v517 = vsub.f32 %v515, %v516
        %v518 = vand.u32 %v517, 4294901760
        %519 = vmatpush1.xpose.msra.mxu0 %v518
        %520 = vmatprep.subr.mxu0 0.0
        %v521 = vand.u32 %v347, 4294901760
        %v522 = vsub.f32 %v347, %v521
        %v523 = vand.u32 %v522, 4294901760
        %v524 = vsub.f32 %v522, %v523
        %v525 = vand.u32 %v524, 4294901760
        %526 = vmatpush1.xpose.msra.mxu0 %v525
        %527 = vmatprep.subr.mxu0 0.0
        %v528 = vand.u32 %v344, 4294901760
        %v529 = vsub.f32 %v344, %v528
        %v530 = vand.u32 %v529, 4294901760
        %v531 = vsub.f32 %v529, %v530
        %v532 = vand.u32 %v531, 4294901760
        %533 = vmatpush1.xpose.msra.mxu0 %v532
        %534 = vmatprep.subr.mxu0 0.0
        %v535 = vand.u32 %v341, 4294901760
        %v536 = vsub.f32 %v341, %v535
        %v537 = vand.u32 %v536, 4294901760
        %v538 = vsub.f32 %v536, %v537
        %v539 = vand.u32 %v538, 4294901760
        %540 = vmatpush1.xpose.msra.mxu0 %v539
        %541 = vmatprep.subr.mxu0 0.0
        %v542 = vand.u32 %v338, 4294901760
        %v543 = vsub.f32 %v338, %v542
        %v544 = vand.u32 %v543, 4294901760
        %v545 = vsub.f32 %v543, %v544
        %v546 = vand.u32 %v545, 4294901760
        %547 = vmatpush1.xpose.msra.mxu0 %v546
        %548 = vmatprep.subr.mxu0 0.0
        %v549 = vand.u32 %v335, 4294901760
        %v550 = vsub.f32 %v335, %v549
        %v551 = vand.u32 %v550, 4294901760
        %v552 = vsub.f32 %v550, %v551
        %v553 = vand.u32 %v552, 4294901760
        %554 = vmatpush1.xpose.msra.mxu0 %v553
        %555 = vmatprep.subr.mxu0 0.0
        %v556 = vand.u32 %v332, 4294901760
        %v557 = vsub.f32 %v332, %v556
        %v558 = vand.u32 %v557, 4294901760
        %v559 = vsub.f32 %v557, %v558
        %v560 = vand.u32 %v559, 4294901760
        %561 = vmatpush1.xpose.msra.mxu0 %v560
        %562 = vmatprep.subr.mxu0 0.0
        %v563 = vand.u32 %v329, 4294901760
        %v564 = vsub.f32 %v329, %v563
        %v565 = vand.u32 %v564, 4294901760
        %v566 = vsub.f32 %v564, %v565
        %v567 = vand.u32 %v566, 4294901760
        %568 = vmatpush1.xpose.msra.mxu0 %v567
        %569 = vmatprep.subr.mxu0 0.0
        %v570 = vand.u32 %v326, 4294901760
        %v571 = vsub.f32 %v326, %v570
        %v572 = vand.u32 %v571, 4294901760
        %v573 = vsub.f32 %v571, %v572
        %v574 = vand.u32 %v573, 4294901760
        %575 = vmatpush1.xpose.msra.mxu0 %v574
        %576 = vmatprep.subr.mxu0 0.0
        %577 = vmatpush2.xpose.msra.mxu0 0.0
        %578 = vmatprep.subr.mxu0 0.0
        %579 = vmatpush2.xpose.msra.mxu0 0.0
        %580 = vmatprep.subr.mxu0 0.0
        %581 = vmatpush2.xpose.msra.mxu0 0.0
        %582 = vmatprep.subr.mxu0 0.0
        %583 = vmatpush2.xpose.msra.mxu0 0.0
        %584 = vmatprep.subr.mxu0 0.0
        %585 = vmatpush2.xpose.msra.mxu0 0.0
        %586 = vmatprep.subr.mxu0 0.0
        %587 = vmatpush2.xpose.msra.mxu0 0.0
        %588 = vmatprep.subr.mxu0 0.0
        %589 = vmatpush2.xpose.msra.mxu0 0.0
        %590 = vmatprep.subr.mxu0 0.0
        %591 = vmatpush2.xpose.msra.mxu0 0.0
        %592 = vmatprep.subr.mxu0 0.0
        %593 = vmatpush2.xpose.msra.mxu0 0.0
        %594 = vmatprep.subr.mxu0 0.0
        %595 = vmatpush2.xpose.msra.mxu0 0.0
        %596 = vmatprep.subr.mxu0 0.0
        %597 = vmatpush2.xpose.msra.mxu0 0.0
        %598 = vmatprep.subr.mxu0 0.0
        %599 = vmatpush2.xpose.msra.mxu0 0.0
        %600 = vmatprep.subr.mxu0 0.0
        %601 = vmatpush2.xpose.msra.mxu0 0.0
        %602 = vmatprep.subr.mxu0 0.0
        %603 = vmatpush2.xpose.msra.mxu0 0.0
        %604 = vmatprep.subr.mxu0 0.0
        %605 = vmatpush2.xpose.msra.mxu0 0.0
        %606 = vmatprep.subr.mxu0 0.0
        %607 = vmatpush2.xpose.msra.mxu0 0.0
        %608 = vmatprep.mubr.f32.mxu0 0.0
        %v609 = vand.u32 %v323, 4294901760
        %610 = vmatmul.mubr.f32.gmra.mxu0 %v609
        %v611 = vpop.f32.mrf.mxu0
        %v612 = vadd.f32 %v461, %v611
        %v613 = vpop.f32.mrf.mxu0
        %614 = vdwg.mxu0
        %615 = vmatprep.subr.mxu0 0.0
        %v616 = vand.u32 %v371, 4294901760
        %v617 = vsub.f32 %v371, %v616
        %618 = vmatpush1.xpose.msra.mxu0 %v617
        %619 = vmatprep.subr.mxu0 0.0
        %v620 = vand.u32 %v368, 4294901760
        %v621 = vsub.f32 %v368, %v620
        %622 = vmatpush1.xpose.msra.mxu0 %v621
        %623 = vmatprep.subr.mxu0 0.0
        %v624 = vand.u32 %v365, 4294901760
        %v625 = vsub.f32 %v365, %v624
        %626 = vmatpush1.xpose.msra.mxu0 %v625
        %627 = vmatprep.subr.mxu0 0.0
        %v628 = vand.u32 %v362, 4294901760
        %v629 = vsub.f32 %v362, %v628
        %630 = vmatpush1.xpose.msra.mxu0 %v629
        %631 = vmatprep.subr.mxu0 0.0
        %v632 = vand.u32 %v359, 4294901760
        %v633 = vsub.f32 %v359, %v632
        %634 = vmatpush1.xpose.msra.mxu0 %v633
        %635 = vmatprep.subr.mxu0 0.0
        %v636 = vand.u32 %v356, 4294901760
        %v637 = vsub.f32 %v356, %v636
        %638 = vmatpush1.xpose.msra.mxu0 %v637
        %639 = vmatprep.subr.mxu0 0.0
        %v640 = vand.u32 %v353, 4294901760
        %v641 = vsub.f32 %v353, %v640
        %642 = vmatpush1.xpose.msra.mxu0 %v641
        %643 = vmatprep.subr.mxu0 0.0
        %v644 = vand.u32 %v350, 4294901760
        %v645 = vsub.f32 %v350, %v644
        %646 = vmatpush1.xpose.msra.mxu0 %v645
        %647 = vmatprep.subr.mxu0 0.0
        %v648 = vand.u32 %v347, 4294901760
        %v649 = vsub.f32 %v347, %v648
        %650 = vmatpush1.xpose.msra.mxu0 %v649
        %651 = vmatprep.subr.mxu0 0.0
        %v652 = vand.u32 %v344, 4294901760
        %v653 = vsub.f32 %v344, %v652
        %654 = vmatpush1.xpose.msra.mxu0 %v653
        %655 = vmatprep.subr.mxu0 0.0
        %v656 = vand.u32 %v341, 4294901760
        %v657 = vsub.f32 %v341, %v656
        %658 = vmatpush1.xpose.msra.mxu0 %v657
        %659 = vmatprep.subr.mxu0 0.0
        %v660 = vand.u32 %v338, 4294901760
        %v661 = vsub.f32 %v338, %v660
        %662 = vmatpush1.xpose.msra.mxu0 %v661
        %663 = vmatprep.subr.mxu0 0.0
        %v664 = vand.u32 %v335, 4294901760
        %v665 = vsub.f32 %v335, %v664
        %666 = vmatpush1.xpose.msra.mxu0 %v665
        %667 = vmatprep.subr.mxu0 0.0
        %v668 = vand.u32 %v332, 4294901760
        %v669 = vsub.f32 %v332, %v668
        %670 = vmatpush1.xpose.msra.mxu0 %v669
        %671 = vmatprep.subr.mxu0 0.0
        %v672 = vand.u32 %v329, 4294901760
        %v673 = vsub.f32 %v329, %v672
        %674 = vmatpush1.xpose.msra.mxu0 %v673
        %675 = vmatprep.subr.mxu0 0.0
        %v676 = vand.u32 %v326, 4294901760
        %v677 = vsub.f32 %v326, %v676
        %678 = vmatpush1.xpose.msra.mxu0 %v677
        %679 = vmatprep.subr.mxu0 0.0
        %680 = vmatpush2.xpose.msra.mxu0 0.0
        %681 = vmatprep.subr.mxu0 0.0
        %682 = vmatpush2.xpose.msra.mxu0 0.0
        %683 = vmatprep.subr.mxu0 0.0
        %684 = vmatpush2.xpose.msra.mxu0 0.0
        %685 = vmatprep.subr.mxu0 0.0
        %686 = vmatpush2.xpose.msra.mxu0 0.0
        %687 = vmatprep.subr.mxu0 0.0
        %688 = vmatpush2.xpose.msra.mxu0 0.0
        %689 = vmatprep.subr.mxu0 0.0
        %690 = vmatpush2.xpose.msra.mxu0 0.0
        %691 = vmatprep.subr.mxu0 0.0
        %692 = vmatpush2.xpose.msra.mxu0 0.0
        %693 = vmatprep.subr.mxu0 0.0
        %694 = vmatpush2.xpose.msra.mxu0 0.0
        %695 = vmatprep.subr.mxu0 0.0
        %696 = vmatpush2.xpose.msra.mxu0 0.0
        %697 = vmatprep.subr.mxu0 0.0
        %698 = vmatpush2.xpose.msra.mxu0 0.0
        %699 = vmatprep.subr.mxu0 0.0
        %700 = vmatpush2.xpose.msra.mxu0 0.0
        %701 = vmatprep.subr.mxu0 0.0
        %702 = vmatpush2.xpose.msra.mxu0 0.0
        %703 = vmatprep.subr.mxu0 0.0
        %704 = vmatpush2.xpose.msra.mxu0 0.0
        %705 = vmatprep.subr.mxu0 0.0
        %706 = vmatpush2.xpose.msra.mxu0 0.0
        %707 = vmatprep.subr.mxu0 0.0
        %708 = vmatpush2.xpose.msra.mxu0 0.0
        %709 = vmatprep.subr.mxu0 0.0
        %710 = vmatpush2.xpose.msra.mxu0 0.0
        %711 = vmatprep.mubr.f32.mxu0 0.0
        %v712 = vand.u32 %v323, 4294901760
        %v713 = vsub.f32 %v323, %v712
        %714 = vmatmul.mubr.f32.gmra.mxu0 %v713
        %v715 = vpop.f32.mrf.mxu0
        %v716 = vadd.f32 %v612, %v715
        %v717 = vpop.f32.mrf.mxu0
        %718 = vdwg.mxu0
        %719 = vmatprep.subr.mxu0 0.0
        %v720 = vand.u32 %v371, 4294901760
        %721 = vmatpush1.xpose.msra.mxu0 %v720
        %722 = vmatprep.subr.mxu0 0.0
        %v723 = vand.u32 %v368, 4294901760
        %724 = vmatpush1.xpose.msra.mxu0 %v723
        %725 = vmatprep.subr.mxu0 0.0
        %v726 = vand.u32 %v365, 4294901760
        %727 = vmatpush1.xpose.msra.mxu0 %v726
        %728 = vmatprep.subr.mxu0 0.0
        %v729 = vand.u32 %v362, 4294901760
        %730 = vmatpush1.xpose.msra.mxu0 %v729
        %731 = vmatprep.subr.mxu0 0.0
        %v732 = vand.u32 %v359, 4294901760
        %733 = vmatpush1.xpose.msra.mxu0 %v732
        %734 = vmatprep.subr.mxu0 0.0
        %v735 = vand.u32 %v356, 4294901760
        %736 = vmatpush1.xpose.msra.mxu0 %v735
        %737 = vmatprep.subr.mxu0 0.0
        %v738 = vand.u32 %v353, 4294901760
        %739 = vmatpush1.xpose.msra.mxu0 %v738
        %740 = vmatprep.subr.mxu0 0.0
        %v741 = vand.u32 %v350, 4294901760
        %742 = vmatpush1.xpose.msra.mxu0 %v741
        %743 = vmatprep.subr.mxu0 0.0
        %v744 = vand.u32 %v347, 4294901760
        %745 = vmatpush1.xpose.msra.mxu0 %v744
        %746 = vmatprep.subr.mxu0 0.0
        %v747 = vand.u32 %v344, 4294901760
        %748 = vmatpush1.xpose.msra.mxu0 %v747
        %749 = vmatprep.subr.mxu0 0.0
        %v750 = vand.u32 %v341, 4294901760
        %751 = vmatpush1.xpose.msra.mxu0 %v750
        %752 = vmatprep.subr.mxu0 0.0
        %v753 = vand.u32 %v338, 4294901760
        %754 = vmatpush1.xpose.msra.mxu0 %v753
        %755 = vmatprep.subr.mxu0 0.0
        %v756 = vand.u32 %v335, 4294901760
        %757 = vmatpush1.xpose.msra.mxu0 %v756
        %758 = vmatprep.subr.mxu0 0.0
        %v759 = vand.u32 %v332, 4294901760
        %760 = vmatpush1.xpose.msra.mxu0 %v759
        %761 = vmatprep.subr.mxu0 0.0
        %v762 = vand.u32 %v329, 4294901760
        %763 = vmatpush1.xpose.msra.mxu0 %v762
        %764 = vmatprep.subr.mxu0 0.0
        %v765 = vand.u32 %v326, 4294901760
        %766 = vmatpush1.xpose.msra.mxu0 %v765
        %767 = vmatprep.subr.mxu0 0.0
        %768 = vmatpush2.xpose.msra.mxu0 0.0
        %769 = vmatprep.subr.mxu0 0.0
        %770 = vmatpush2.xpose.msra.mxu0 0.0
        %771 = vmatprep.subr.mxu0 0.0
        %772 = vmatpush2.xpose.msra.mxu0 0.0
        %773 = vmatprep.subr.mxu0 0.0
        %774 = vmatpush2.xpose.msra.mxu0 0.0
        %775 = vmatprep.subr.mxu0 0.0
        %776 = vmatpush2.xpose.msra.mxu0 0.0
        %777 = vmatprep.subr.mxu0 0.0
        %778 = vmatpush2.xpose.msra.mxu0 0.0
        %779 = vmatprep.subr.mxu0 0.0
        %780 = vmatpush2.xpose.msra.mxu0 0.0
        %781 = vmatprep.subr.mxu0 0.0
        %782 = vmatpush2.xpose.msra.mxu0 0.0
        %783 = vmatprep.subr.mxu0 0.0
        %784 = vmatpush2.xpose.msra.mxu0 0.0
        %785 = vmatprep.subr.mxu0 0.0
        %786 = vmatpush2.xpose.msra.mxu0 0.0
        %787 = vmatprep.subr.mxu0 0.0
        %788 = vmatpush2.xpose.msra.mxu0 0.0
        %789 = vmatprep.subr.mxu0 0.0
        %790 = vmatpush2.xpose.msra.mxu0 0.0
        %791 = vmatprep.subr.mxu0 0.0
        %792 = vmatpush2.xpose.msra.mxu0 0.0
        %793 = vmatprep.subr.mxu0 0.0
        %794 = vmatpush2.xpose.msra.mxu0 0.0
        %795 = vmatprep.subr.mxu0 0.0
        %796 = vmatpush2.xpose.msra.mxu0 0.0
        %797 = vmatprep.subr.mxu0 0.0
        %798 = vmatpush2.xpose.msra.mxu0 0.0
        %799 = vmatprep.mubr.f32.mxu0 0.0
        %v800 = vand.u32 %v323, 4294901760
        %v801 = vsub.f32 %v323, %v800
        %v802 = vand.u32 %v801, 4294901760
        %803 = vmatmul.mubr.f32.gmra.mxu0 %v802
        %v804 = vpop.f32.mrf.mxu0
        %v805 = vadd.f32 %v716, %v804
        %v806 = vpop.f32.mrf.mxu0
        %807 = vdwg.mxu0
        %808 = vmatprep.subr.mxu0 0.0
        %v809 = vand.u32 %v371, 4294901760
        %v810 = vsub.f32 %v371, %v809
        %v811 = vand.u32 %v810, 4294901760
        %812 = vmatpush1.xpose.msra.mxu0 %v811
        %813 = vmatprep.subr.mxu0 0.0
        %v814 = vand.u32 %v368, 4294901760
        %v815 = vsub.f32 %v368, %v814
        %v816 = vand.u32 %v815, 4294901760
        %817 = vmatpush1.xpose.msra.mxu0 %v816
        %818 = vmatprep.subr.mxu0 0.0
        %v819 = vand.u32 %v365, 4294901760
        %v820 = vsub.f32 %v365, %v819
        %v821 = vand.u32 %v820, 4294901760
        %822 = vmatpush1.xpose.msra.mxu0 %v821
        %823 = vmatprep.subr.mxu0 0.0
        %v824 = vand.u32 %v362, 4294901760
        %v825 = vsub.f32 %v362, %v824
        %v826 = vand.u32 %v825, 4294901760
        %827 = vmatpush1.xpose.msra.mxu0 %v826
        %828 = vmatprep.subr.mxu0 0.0
        %v829 = vand.u32 %v359, 4294901760
        %v830 = vsub.f32 %v359, %v829
        %v831 = vand.u32 %v830, 4294901760
        %832 = vmatpush1.xpose.msra.mxu0 %v831
        %833 = vmatprep.subr.mxu0 0.0
        %v834 = vand.u32 %v356, 4294901760
        %v835 = vsub.f32 %v356, %v834
        %v836 = vand.u32 %v835, 4294901760
        %837 = vmatpush1.xpose.msra.mxu0 %v836
        %838 = vmatprep.subr.mxu0 0.0
        %v839 = vand.u32 %v353, 4294901760
        %v840 = vsub.f32 %v353, %v839
        %v841 = vand.u32 %v840, 4294901760
        %842 = vmatpush1.xpose.msra.mxu0 %v841
        %843 = vmatprep.subr.mxu0 0.0
        %v844 = vand.u32 %v350, 4294901760
        %v845 = vsub.f32 %v350, %v844
        %v846 = vand.u32 %v845, 4294901760
        %847 = vmatpush1.xpose.msra.mxu0 %v846
        %848 = vmatprep.subr.mxu0 0.0
        %v849 = vand.u32 %v347, 4294901760
        %v850 = vsub.f32 %v347, %v849
        %v851 = vand.u32 %v850, 4294901760
        %852 = vmatpush1.xpose.msra.mxu0 %v851
        %853 = vmatprep.subr.mxu0 0.0
        %v854 = vand.u32 %v344, 4294901760
        %v855 = vsub.f32 %v344, %v854
        %v856 = vand.u32 %v855, 4294901760
        %857 = vmatpush1.xpose.msra.mxu0 %v856
        %858 = vmatprep.subr.mxu0 0.0
        %v859 = vand.u32 %v341, 4294901760
        %v860 = vsub.f32 %v341, %v859
        %v861 = vand.u32 %v860, 4294901760
        %862 = vmatpush1.xpose.msra.mxu0 %v861
        %863 = vmatprep.subr.mxu0 0.0
        %v864 = vand.u32 %v338, 4294901760
        %v865 = vsub.f32 %v338, %v864
        %v866 = vand.u32 %v865, 4294901760
        %867 = vmatpush1.xpose.msra.mxu0 %v866
        %868 = vmatprep.subr.mxu0 0.0
        %v869 = vand.u32 %v335, 4294901760
        %v870 = vsub.f32 %v335, %v869
        %v871 = vand.u32 %v870, 4294901760
        %872 = vmatpush1.xpose.msra.mxu0 %v871
        %873 = vmatprep.subr.mxu0 0.0
        %v874 = vand.u32 %v332, 4294901760
        %v875 = vsub.f32 %v332, %v874
        %v876 = vand.u32 %v875, 4294901760
        %877 = vmatpush1.xpose.msra.mxu0 %v876
        %878 = vmatprep.subr.mxu0 0.0
        %v879 = vand.u32 %v329, 4294901760
        %v880 = vsub.f32 %v329, %v879
        %v881 = vand.u32 %v880, 4294901760
        %882 = vmatpush1.xpose.msra.mxu0 %v881
        %883 = vmatprep.subr.mxu0 0.0
        %v884 = vand.u32 %v326, 4294901760
        %v885 = vsub.f32 %v326, %v884
        %v886 = vand.u32 %v885, 4294901760
        %887 = vmatpush1.xpose.msra.mxu0 %v886
        %888 = vmatprep.subr.mxu0 0.0
        %889 = vmatpush2.xpose.msra.mxu0 0.0
        %890 = vmatprep.subr.mxu0 0.0
        %891 = vmatpush2.xpose.msra.mxu0 0.0
        %892 = vmatprep.subr.mxu0 0.0
        %893 = vmatpush2.xpose.msra.mxu0 0.0
        %894 = vmatprep.subr.mxu0 0.0
        %895 = vmatpush2.xpose.msra.mxu0 0.0
        %896 = vmatprep.subr.mxu0 0.0
        %897 = vmatpush2.xpose.msra.mxu0 0.0
        %898 = vmatprep.subr.mxu0 0.0
        %899 = vmatpush2.xpose.msra.mxu0 0.0
        %900 = vmatprep.subr.mxu0 0.0
        %901 = vmatpush2.xpose.msra.mxu0 0.0
        %902 = vmatprep.subr.mxu0 0.0
        %903 = vmatpush2.xpose.msra.mxu0 0.0
        %904 = vmatprep.subr.mxu0 0.0
        %905 = vmatpush2.xpose.msra.mxu0 0.0
        %906 = vmatprep.subr.mxu0 0.0
        %907 = vmatpush2.xpose.msra.mxu0 0.0
        %908 = vmatprep.subr.mxu0 0.0
        %909 = vmatpush2.xpose.msra.mxu0 0.0
        %910 = vmatprep.subr.mxu0 0.0
        %911 = vmatpush2.xpose.msra.mxu0 0.0
        %912 = vmatprep.subr.mxu0 0.0
        %913 = vmatpush2.xpose.msra.mxu0 0.0
        %914 = vmatprep.subr.mxu0 0.0
        %915 = vmatpush2.xpose.msra.mxu0 0.0
        %916 = vmatprep.subr.mxu0 0.0
        %917 = vmatpush2.xpose.msra.mxu0 0.0
        %918 = vmatprep.subr.mxu0 0.0
        %919 = vmatpush2.xpose.msra.mxu0 0.0
        %920 = vmatprep.mubr.f32.mxu0 0.0
        %v921 = vand.u32 %v323, 4294901760
        %922 = vmatmul.mubr.f32.gmra.mxu0 %v921
        %v923 = vpop.f32.mrf.mxu0
        %v924 = vadd.f32 %v805, %v923
        %v925 = vpop.f32.mrf.mxu0
        %926 = vdwg.mxu0
        %927 = vmatprep.subr.mxu0 0.0
        %v928 = vand.u32 %v371, 4294901760
        %929 = vmatpush1.xpose.msra.mxu0 %v928
        %930 = vmatprep.subr.mxu0 0.0
        %v931 = vand.u32 %v368, 4294901760
        %932 = vmatpush1.xpose.msra.mxu0 %v931
        %933 = vmatprep.subr.mxu0 0.0
        %v934 = vand.u32 %v365, 4294901760
        %935 = vmatpush1.xpose.msra.mxu0 %v934
        %936 = vmatprep.subr.mxu0 0.0
        %v937 = vand.u32 %v362, 4294901760
        %938 = vmatpush1.xpose.msra.mxu0 %v937
        %939 = vmatprep.subr.mxu0 0.0
        %v940 = vand.u32 %v359, 4294901760
        %941 = vmatpush1.xpose.msra.mxu0 %v940
        %942 = vmatprep.subr.mxu0 0.0
        %v943 = vand.u32 %v356, 4294901760
        %944 = vmatpush1.xpose.msra.mxu0 %v943
        %945 = vmatprep.subr.mxu0 0.0
        %v946 = vand.u32 %v353, 4294901760
        %947 = vmatpush1.xpose.msra.mxu0 %v946
        %948 = vmatprep.subr.mxu0 0.0
        %v949 = vand.u32 %v350, 4294901760
        %950 = vmatpush1.xpose.msra.mxu0 %v949
        %951 = vmatprep.subr.mxu0 0.0
        %v952 = vand.u32 %v347, 4294901760
        %953 = vmatpush1.xpose.msra.mxu0 %v952
        %954 = vmatprep.subr.mxu0 0.0
        %v955 = vand.u32 %v344, 4294901760
        %956 = vmatpush1.xpose.msra.mxu0 %v955
        %957 = vmatprep.subr.mxu0 0.0
        %v958 = vand.u32 %v341, 4294901760
        %959 = vmatpush1.xpose.msra.mxu0 %v958
        %960 = vmatprep.subr.mxu0 0.0
        %v961 = vand.u32 %v338, 4294901760
        %962 = vmatpush1.xpose.msra.mxu0 %v961
        %963 = vmatprep.subr.mxu0 0.0
        %v964 = vand.u32 %v335, 4294901760
        %965 = vmatpush1.xpose.msra.mxu0 %v964
        %966 = vmatprep.subr.mxu0 0.0
        %v967 = vand.u32 %v332, 4294901760
        %968 = vmatpush1.xpose.msra.mxu0 %v967
        %969 = vmatprep.subr.mxu0 0.0
        %v970 = vand.u32 %v329, 4294901760
        %971 = vmatpush1.xpose.msra.mxu0 %v970
        %972 = vmatprep.subr.mxu0 0.0
        %v973 = vand.u32 %v326, 4294901760
        %974 = vmatpush1.xpose.msra.mxu0 %v973
        %975 = vmatprep.subr.mxu0 0.0
        %976 = vmatpush2.xpose.msra.mxu0 0.0
        %977 = vmatprep.subr.mxu0 0.0
        %978 = vmatpush2.xpose.msra.mxu0 0.0
        %979 = vmatprep.subr.mxu0 0.0
        %980 = vmatpush2.xpose.msra.mxu0 0.0
        %981 = vmatprep.subr.mxu0 0.0
        %982 = vmatpush2.xpose.msra.mxu0 0.0
        %983 = vmatprep.subr.mxu0 0.0
        %984 = vmatpush2.xpose.msra.mxu0 0.0
        %985 = vmatprep.subr.mxu0 0.0
        %986 = vmatpush2.xpose.msra.mxu0 0.0
        %987 = vmatprep.subr.mxu0 0.0
        %988 = vmatpush2.xpose.msra.mxu0 0.0
        %989 = vmatprep.subr.mxu0 0.0
        %990 = vmatpush2.xpose.msra.mxu0 0.0
        %991 = vmatprep.subr.mxu0 0.0
        %992 = vmatpush2.xpose.msra.mxu0 0.0
        %993 = vmatprep.subr.mxu0 0.0
        %994 = vmatpush2.xpose.msra.mxu0 0.0
        %995 = vmatprep.subr.mxu0 0.0
        %996 = vmatpush2.xpose.msra.mxu0 0.0
        %997 = vmatprep.subr.mxu0 0.0
        %998 = vmatpush2.xpose.msra.mxu0 0.0
        %999 = vmatprep.subr.mxu0 0.0
        %1000 = vmatpush2.xpose.msra.mxu0 0.0
        %1001 = vmatprep.subr.mxu0 0.0
        %1002 = vmatpush2.xpose.msra.mxu0 0.0
        %1003 = vmatprep.subr.mxu0 0.0
        %1004 = vmatpush2.xpose.msra.mxu0 0.0
        %1005 = vmatprep.subr.mxu0 0.0
        %1006 = vmatpush2.xpose.msra.mxu0 0.0
        %1007 = vmatprep.mubr.f32.mxu0 0.0
        %v1008 = vand.u32 %v323, 4294901760
        %1009 = vmatmul.mubr.f32.gmra.mxu0 %v1008
        %v1010 = vpop.f32.mrf.mxu0
        %v1011 = vadd.f32 %v924, %v1010
        %v1012 = vpop.f32.mrf.mxu0
        %1013 = vdwg.mxu0
        %v1014 = vld [vmem:[%s299] sm:$0xff]
        %1016 = vset.pattern.permute.xlu0 0
        %1017 = vperm.xlu0 %1016, %v1014
        %v1018 = vpop.permute.xlu0 %1017
        %v1020 = vmul.f32 %v1011, %v1018
        %v1021 = vld [vmem:[%s295] sm:$0x1]
        %v1023 = vlaneseq
        %v1024 = vshrl.u32 %v1023, 7
        %v1025 = vsub.s32 0, %v1024
        %v1026 = vrot.slane %v1021, %v1025
        %v1028 = vmul.f32 %v1020, %v1026
        %v1029 = vld [vmem:[%s303] sm:$0xff]
        %s1030 = smul.u32 %s24, 128
        %v1031 = vlaneseq
        %v1032 = vand.u32 %v1031, 127
        %v1033 = vstv %s1030
        %v1034 = vadd.s32 %v1032, %v1033
        %1035 = vset.pattern.permute.xlu0 0
        %1036 = vperm.xlu0 %1035, %v1029
        %v1037 = vpop.permute.xlu0 %1036
        %vm1038 = vcmp.eq.s32.totalorder %v1034, %v1037
        %v1039 = vsel %vm1038, %v1028, 0.0
        %1040 = vadd.xlane.f32.xlu0 %v1039
        %v1041 = vpop.xlane.xlu0 %1040
        %v1042 = vmul.f32 %v1041, 0.033333335
        %v1043 = vmul.f32 %v1042, %v1042
        %v1044 = vsub.f32 1.0, %v1043
        %v1045 = vmax.f32 %v1044, 0.0
        %v1046 = vmin.f32 %v1045, 1.0
        %v1047 = vrsqrt.pop %v1046
        %v1048 = vmul.f32 %v1046, %v1047
        %vm1049 = vcmp.eq.f32.partialorder %v1046, inf
        %v1050 = vsel %vm1049, %v1046, %v1048
        %vm1051 = vcmp.eq.f32.partialorder %v1046, 0.0
        %v1052 = vand.u32 %v1046, 2147483648
        %v1053 = vsel %vm1051, %v1052, %v1050
        %v1054 = vmul.f32 %v1042, 0.87758255
        %v1055 = vmul.f32 %v1053, 0.47942555
        %v1056 = vsub.f32 %v1054, %v1055
        %vm1057 = vcmp.gt.f32.partialorder %v1042, -0.87758255
        %v1058 = vsub.f32 %v1042, 0.23971277
        %v1059 = vsel %vm1057, %v1056, %v1058
        %v1060 = vmul.f32 %v1059, 30.0
        %v1061 = vsel %vm1038, %v1060, %v1028
        %1062 = vst [vmem:[%s282] sm:$0xff] %v1061
        %s1063 = sand.u32 %s171, 1
        %s1064 = scalar_lea.sflag [#allocation3], %s1063
        %s1065 = sand.u32 %s171, 1
        %s1066 = smul.addr %s1065, 8
        %s1067 = scalar_lea.vmem [#allocation2], %s1066
        // Predicated region
        $region41: #{tpu_custom_call.1} parent=39 // pred_check
          %p1068 = pneg %p181
        $region42: #{tpu_custom_call.1} parent=39 // pred_check_branch
          %1070 = sbr.rel (%p1068) target = $region44
        $region43: #{tpu_custom_call.1} parent=39 // pred_region
          %s1072 = ssub.s32 128, 128
          %1073 = vsyncadd %s1064, %s1072
          %s1074 = smul.addr %s23, 2
          %s1075 = sadd.s32 %s24, %s1074
          %s1076 = smul.addr %s1075, 128
          %s1077 = scalar_lea.hbm %s5, %s1076
          %s1079 = sshll.u32 %s1067, 4
          %s1080 = int_to_ptr.vmem [resolvable:$true] %s1079
          %1082 = dma.vmem_to_hbm [thread:$0]  %s1080, 128, %s1077, %s1064
        $region44: #{tpu_custom_call.1} parent=39 // pred_fallthru
          _
      $region40: #{tpu_custom_call.1} parent=5 // pred_fallthru
        _
      %p1083 = scmp.le.s32.totalorder 2, %s14
      // Predicated region
      $region45: #{tpu_custom_call.1} parent=5 // pred_check
        %p1084 = pneg %p1083
      $region46: #{tpu_custom_call.1} parent=5 // pred_check_branch
        %1086 = sbr.rel (%p1084) target = $region48
      $region47: #{tpu_custom_call.1} parent=5 // pred_region
        %s1087 = ssub.s32 %s14, 2
        // Predicated region
        $region49: #{tpu_custom_call.1} parent=47 // pred_check
          %p1088 = pneg %p187
        $region50: #{tpu_custom_call.1} parent=47 // pred_check_branch
          %1090 = sbr.rel (%p1088) target = $region52
        $region51: #{tpu_custom_call.1} parent=47 // pred_region
          %s1091 = sand.u32 %s172, 1
          %s1092 = scalar_lea.sflag [#allocation3], %s1091
          %s1093 = sand.u32 %s172, 1
          %s1094 = smul.addr %s1093, 8
          %s1095 = scalar_lea.vmem [#allocation2], %s1094
          %1096 = dma.done %s1092, 128
        $region52: #{tpu_custom_call.1} parent=47 // pred_fallthru
          _
      $region48: #{tpu_custom_call.1} parent=5 // pred_fallthru
        _
    $region6: #{tpu_custom_call.1} parent=1 // loop_footer
      %s18 = sadd.s32 1, %s14
    $region7: #{tpu_custom_call.1} parent=1 // loop_footer_branch
      %13 = sbr.rel target = $region3
    $region8: #{tpu_custom_call.1} parent=1 // loop_exit
      _
    %1097 = vsyncpa [#allocation3], 1
    %s1098 = scalar_lea.sflag [#allocation3], 1
    %1099 = vsyncpa %s1098, 1

</llo_original>
